<compile_context>
chip_gen: v6e
topology: v6e:2x2x1
jax: 0.10.0
libtpu: 0.0.40
codegen_flags: <defaults>
</compile_context>

<pallas_src>
import math

import jax
import jax.numpy as jnp
from jax.experimental import pallas as pl
from jax.experimental.pallas import tpu as pltpu


_LANE = 128


def _round_up(x, m):
    return ((x + m - 1) // m) * m


def _pick_tile(padded, cap, unit):
    """Largest multiple of `unit` that divides `padded` and is <= cap."""
    if padded <= cap:
        return padded
    best = unit
    t = unit
    while t <= cap:
        if padded % t == 0:
            best = t
        t += unit
    return best


def _vmem_capacity_bytes():
    try:
        info = pltpu.get_tpu_info()
        cap = getattr(info, "vmem_capacity_bytes", None)
        if cap:
            return int(cap)
    except Exception:
        pass
    return 64 * 1024 * 1024  # conservative default (v7x-class)


def _tpu_config(stream_itemsize):
    cap = _vmem_capacity_bytes()
    if cap >= 100 * 1024 * 1024:
        # v5e / v6e: 128 MiB VMEM, 1 TensorCore.
        return dict(tm_cap=1024, tn_cap=1024, tk_cap=1024, k_strip_max=2048,
                    vmem_limit=96 * 1024 * 1024, split_for_cores=False)
    # v7x-class: 64 MiB VMEM per TC, 2 TCs share the grid via the parallel axes.
    if stream_itemsize <= 2:
        return dict(tm_cap=1024, tn_cap=1024, tk_cap=1024, k_strip_max=2048,
                    vmem_limit=40 * 1024 * 1024, split_for_cores=True)
    return dict(tm_cap=512, tn_cap=512, tk_cap=512, k_strip_max=1024,
                vmem_limit=40 * 1024 * 1024, split_for_cores=True)


def _whitening_kernel_strip(x_ref, wt_ref, bproj_ref, o_ref):
    # Fast path: whole K strip resident -> no reduction axis, no scratch.
    acc = jnp.dot(x_ref[...], wt_ref[...], preferred_element_type=jnp.float32)
    o_ref[...] = (acc - bproj_ref[...]).astype(o_ref.dtype)


def _whitening_kernel_acc(x_ref, wt_ref, bproj_ref, o_ref, acc_ref):
    # x_ref: (TM,TK)  wt_ref: (TK,TN)  bproj_ref: (1,TN) f32
    # o_ref: (TM,TN)  acc_ref: (TM,TN) f32, resident across the K axis.
    k = pl.program_id(2)

    @pl.when(k == 0)
    def _():
        # Fold the projected bias into the accumulator init (-b @ W^T).
        acc_ref[...] = jnp.broadcast_to(-bproj_ref[...], acc_ref.shape)

    acc_ref[...] += jnp.dot(
        x_ref[...], wt_ref[...], preferred_element_type=jnp.float32
    )

    @pl.when(k == pl.num_programs(2) - 1)
    def _():
        o_ref[...] = acc_ref[...].astype(o_ref.dtype)


def whitening_forward(x, bias, weight, *, stream_dtype=jnp.bfloat16):
    """y = (dropout(x) - bias) @ weight.T   with dropout p=0.0 (eval) omitted.

    x: (..., input_size); bias: (input_size,); weight: (output_size, input_size).
    stream_dtype: dtype the two big streamed operands (x, W^T) are cast to.
      bf16 halves HBM traffic (accumulation + bias subtract stay f32).
      Pass None to keep exact input-dtype semantics.
    """
    in_size = x.shape[-1]
    out_size = weight.shape[0]
    lead = x.shape[:-1]
    m = int(math.prod(lead)) if lead else 1

    out_dtype = x.dtype
    op_dtype = jnp.dtype(stream_dtype) if stream_dtype is not None else jnp.dtype(x.dtype)

    # Projected bias, once, in f32: (x - b) @ W^T = x @ W^T - (b @ W^T).
    bias_proj = jnp.dot(
        weight.astype(jnp.float32), bias.astype(jnp.float32)
    ).reshape(1, out_size)

    x2d = x.reshape(m, in_size).astype(op_dtype)
    wt = weight.T.astype(op_dtype)  # (K, N)

    cfg = _tpu_config(op_dtype.itemsize)

    # Minimal padding: sublane unit on M, lane (128) on K / N.
    m_unit = 16 if op_dtype.itemsize < 4 else 8
    m_pad = _round_up(m, m_unit)
    k_pad = _round_up(in_size, _LANE)
    n_pad = _round_up(out_size, _LANE)

    if (m_pad, k_pad) != (m, in_size):
        x2d = jnp.pad(x2d, ((0, m_pad - m), (0, k_pad - in_size)))
    if (k_pad, n_pad) != (in_size, out_size):
        wt = jnp.pad(wt, ((0, k_pad - in_size), (0, n_pad - out_size)))
    if n_pad != out_size:
        bias_proj = jnp.pad(bias_proj, ((0, 0), (0, n_pad - out_size)))
    bias_proj = bias_proj.astype(jnp.float32)

    tm = _pick_tile(m_pad, cfg["tm_cap"], m_unit)
    tn = _pick_tile(n_pad, cfg["tn_cap"], _LANE)
    use_k_strip = k_pad <= cfg["k_strip_max"]

    # v7x: make sure the parallel axes expose >= 2 blocks so both TCs get work.
    if cfg["split_for_cores"] and (m_pad // tm) * (n_pad // tn) == 1:
        if m_pad % (2 * m_unit) == 0:
            tm = m_pad // 2
        elif n_pad % (2 * _LANE) == 0:
            tn = n_pad // 2

    cost = pl.CostEstimate(
        flops=2 * m_pad * k_pad * n_pad,
        transcendentals=0,
        bytes_accessed=op_dtype.itemsize * (m_pad * k_pad + k_pad * n_pad)
        + jnp.dtype(out_dtype).itemsize * m_pad * n_pad,
    )

    if use_k_strip:
        grid = (m_pad // tm, n_pad // tn)
        out2d = pl.pallas_call(
            _whitening_kernel_strip,
            out_shape=jax.ShapeDtypeStruct((m_pad, n_pad), out_dtype),
            grid_spec=pltpu.PrefetchScalarGridSpec(
                num_scalar_prefetch=0,
                grid=grid,
                in_specs=[
                    pl.BlockSpec((tm, k_pad), lambda i, j: (i, 0)),   # x strip
                    pl.BlockSpec((k_pad, tn), lambda i, j: (0, j)),   # W^T strip
                    pl.BlockSpec((1, tn), lambda i, j: (0, j)),       # projected bias
                ],
                out_specs=pl.BlockSpec((tm, tn), lambda i, j: (i, j)),
            ),
            compiler_params=pltpu.CompilerParams(
                dimension_semantics=("parallel", "parallel"),
                vmem_limit_bytes=cfg["vmem_limit"],
            ),
            cost_estimate=cost,
        )(x2d, wt, bias_proj)
    else:
        tk = _pick_tile(k_pad, cfg["tk_cap"], _LANE)
        grid = (m_pad // tm, n_pad // tn, k_pad // tk)
        out2d = pl.pallas_call(
            _whitening_kernel_acc,
            out_shape=jax.ShapeDtypeStruct((m_pad, n_pad), out_dtype),
            grid_spec=pltpu.PrefetchScalarGridSpec(
                num_scalar_prefetch=0,
                grid=grid,
                in_specs=[
                    pl.BlockSpec((tm, tk), lambda i, j, k: (i, k)),   # x tile
                    pl.BlockSpec((tk, tn), lambda i, j, k: (k, j)),   # W^T tile
                    pl.BlockSpec((1, tn), lambda i, j, k: (0, j)),    # projected bias
                ],
                out_specs=pl.BlockSpec((tm, tn), lambda i, j, k: (i, j)),
                scratch_shapes=[pltpu.VMEM((tm, tn), jnp.float32)],
            ),
            compiler_params=pltpu.CompilerParams(
                dimension_semantics=("parallel", "parallel", "arbitrary"),
                vmem_limit_bytes=cfg["vmem_limit"],
            ),
            cost_estimate=cost,
        )(x2d, wt, bias_proj)

    out2d = out2d[:m, :out_size]
    return out2d.reshape(*lead, out_size)


def init_whitening_params(key, input_size, output_size, dtype=jnp.float32):
    """Mirrors the PyTorch module init: zero bias, xavier_normal_ weight."""
    bias = jnp.zeros((input_size,), dtype=dtype)
    std = math.sqrt(2.0 / (input_size + output_size))
    weight = std * jax.random.normal(key, (output_size, input_size), dtype=dtype)
    return bias, weight


# TODO(synk): nn.Dropout with p>0 (training mode) has no Pallas path here; the
#             bias-fold is only valid for p=0 / eval, which is what this implements.

if __name__ == "__main__":
    key = jax.random.PRNGKey(0)
    k_x, k_w, k_b = jax.random.split(key, 3)

    batch, seq, input_size, output_size = 2, 8, 32, 64
    x = jax.random.normal(k_x, (batch, seq, input_size), dtype=jnp.float32)
    _, weight = init_whitening_params(k_w, input_size, output_size)
    # Nonzero bias so the (x - bias) path is actually exercised (learnable param).
    bias = 0.1 * jax.random.normal(k_b, (input_size,), dtype=jnp.float32)

    # Reference (same math as the PyTorch forward in eval mode), in f32.
    y_ref = (x - bias) @ weight.T

    # Default (bf16-streamed) path: looser tolerance from the operand cast.
    y_bf16 = jax.block_until_ready(whitening_forward(x, bias, weight))
    assert y_bf16.shape == (batch, seq, output_size)
    assert jnp.allclose(y_bf16, y_ref, atol=5e-2, rtol=5e-2), float(
        jnp.max(jnp.abs(y_bf16 - y_ref))
    )

    # Exact-dtype path (no operand downcast): tight tolerance.
    y_f32 = jax.block_until_ready(whitening_forward(x, bias, weight, stream_dtype=None))
    assert jnp.allclose(y_f32, y_ref, atol=1e-4, rtol=1e-4), float(
        jnp.max(jnp.abs(y_f32 - y_ref))
    )

    print("KERNEL_OK")
</pallas_src>

<mosaic_0001>
module attributes {stable_mosaic.version = 11 : i64} {
  func.func @_whitening_kernel_strip(%arg0: i32, %arg1: i32, %arg2: memref<16x128xbf16, #tpu.memory_space<vmem>>, %arg3: memref<128x128xbf16, #tpu.memory_space<vmem>>, %arg4: memref<1x128xf32, #tpu.memory_space<vmem>>, %arg5: memref<16x128xf32, #tpu.memory_space<vmem>>) attributes {dimension_semantics = [#tpu.dimension_semantics<parallel>, #tpu.dimension_semantics<parallel>], iteration_bounds = array<i64: 1, 1>, scalar_prefetch = 0 : i64, scratch_operands = 0 : i64, tpu.core_type = #tpu.core_type<tc>, window_params = [{transform_indices = @transform_0, window_bounds = array<i64: 16, 128>}, {transform_indices = @transform_1, window_bounds = array<i64: 128, 128>}, {transform_indices = @transform_2, window_bounds = array<i64: 1, 128>}, {transform_indices = @transform_3, window_bounds = array<i64: 16, 128>}]} {
    %c0 = arith.constant 0 : index
    %c0_0 = arith.constant 0 : index
    %0 = vector.load %arg2[%c0, %c0_0] : memref<16x128xbf16, #tpu.memory_space<vmem>>, vector<16x128xbf16>
    %c0_1 = arith.constant 0 : index
    %c0_2 = arith.constant 0 : index
    %1 = vector.load %arg3[%c0_1, %c0_2] : memref<128x128xbf16, #tpu.memory_space<vmem>>, vector<128x128xbf16>
    %cst = arith.constant dense<0.000000e+00> : vector<16x128xf32>
    %2 = tpu.matmul %0, %1, %cst {dimension_numbers = #tpu.dot_dimension_numbers<[1], [0], [0], [1], [0, 0, 1, 1], [], []>} : vector<16x128xbf16>, vector<128x128xbf16>, vector<16x128xf32> -> vector<16x128xf32>
    %c0_3 = arith.constant 0 : index
    %c0_4 = arith.constant 0 : index
    %3 = vector.load %arg4[%c0_3, %c0_4] : memref<1x128xf32, #tpu.memory_space<vmem>>, vector<1x128xf32>
    %4 = vector.broadcast %3 : vector<1x128xf32> to vector<16x128xf32>
    %5 = arith.subf %2, %4 : vector<16x128xf32>
    %c0_5 = arith.constant 0 : index
    %c0_6 = arith.constant 0 : index
    %6 = vector.load %arg5[%c0_5, %c0_6] : memref<16x128xf32, #tpu.memory_space<vmem>>, vector<16x128xf32>
    tpu.vector_store %arg5[%c0_5, %c0_6], %5 {strides = array<i32>} : memref<16x128xf32, #tpu.memory_space<vmem>>, vector<16x128xf32>,
    return
  }
  func.func @transform_0(%arg0: i32, %arg1: i32) -> (i32, i32) {
    %c0_i32 = arith.constant 0 : i32
    %c0_i32_0 = arith.constant 0 : i32
    return %arg0, %c0_i32 : i32, i32
  }
  func.func @transform_1(%arg0: i32, %arg1: i32) -> (i32, i32) {
    %c0_i32 = arith.constant 0 : i32
    %c0_i32_0 = arith.constant 0 : i32
    return %c0_i32, %arg1 : i32, i32
  }
  func.func @transform_2(%arg0: i32, %arg1: i32) -> (i32, i32) {
    %c0_i32 = arith.constant 0 : i32
    %c0_i32_0 = arith.constant 0 : i32
    return %c0_i32, %arg1 : i32, i32
  }
  func.func @transform_3(%arg0: i32, %arg1: i32) -> (i32, i32) {
    %c0_i32 = arith.constant 0 : i32
    return %arg0, %arg1 : i32, i32
  }
}

</mosaic_0001>

<llo_original>
// kernel: tpu_custom_call.1
$region0: #{tpu_custom_call.1}
  #allocation0 [shape = 'u32[]', space=smem, size = 0x4, offset = 0x4, fixed_abs, tag = 'smem constant byte address 0x4 - core index']
  #allocation1 [shape = 'u32[144,128]{1,0:T(1,128)}', space=vmem, size = 0x12000, scoped, tag = 'internal scratch']
  %s0 = inlined_call_operand.hbm [shape: bf16[16,128], index: 0, kind: input, shape index: {}]
  %s1 = inlined_call_operand.hbm [shape: bf16[128,128], index: 1, kind: input, shape index: {}]
  %s2 = inlined_call_operand.vmem [shape: f32[1,128], index: 2, kind: input, shape index: {}]
  %s3 = inlined_call_operand.hbm [shape: f32[16,128], index: 3, kind: output, shape index: {}]
  %s4 = sld [smem:[#allocation0]]
  $region30: #{tpu_custom_call.1} parent=0
    _
  %s6 = ssub.s32 1, %s4
  %s7 = scalar_select 0, %s6, %s4
  $region1: #{tpu_custom_call.1} parent=0
    #allocation2 [shape = 'u8[4096]{0}', space=vmem, size = 0x1000, scoped, tag = 'input window, operand 0, single buffered']
    #allocation3 [shape = 's32[1]{0}', space=sflag, size = 0x4, scoped, tag = 'scoped memory for tpu_custom_call.1']
    #allocation4 [shape = 's32[1]{0}', space=sflag, size = 0x4, scoped, tag = 'scoped memory for tpu_custom_call.1']
    #allocation5 [shape = 'u8[32768]{0}', space=vmem, size = 0x8000, scoped, tag = 'input window, operand 1, single buffered']
    #allocation6 [shape = 's32[1]{0}', space=sflag, size = 0x4, scoped, tag = 'scoped memory for tpu_custom_call.1']
    #allocation7 [shape = 'u8[8192]{0}', space=vmem, size = 0x2000, scoped, tag = 'output window, operand 0, single buffered']
    %8 = vsyncpa [#allocation3], 0
    %9 = vsyncpa [#allocation6], 0
    %10 = vsyncpa [#allocation4], 0
    // Predicated region
    $region2: #{tpu_custom_call.1} parent=1 // pred_check
      _
    $region3: #{tpu_custom_call.1} parent=1 // pred_check_branch
      %12 = sbr.rel (0) target = $region5
    $region4: #{tpu_custom_call.1} parent=1 // pred_region
      %s14 = ssub.s32 128, 128
      %15 = vsyncadd [#allocation3], %s14
      %s16 = sshll.u32 [#allocation2], 4
      %s17 = int_to_ptr.vmem [resolvable:$true] %s16
      %22 = dma.hbm_to_vmem [thread:$0]  %s0, 128, %s17, [#allocation3], 64, 64, 4
    $region5: #{tpu_custom_call.1} parent=1 // pred_fallthru
      _
    // Predicated region
    $region6: #{tpu_custom_call.1} parent=1 // pred_check
      _
    $region7: #{tpu_custom_call.1} parent=1 // pred_check_branch
      %24 = sbr.rel (0) target = $region9
    $region8: #{tpu_custom_call.1} parent=1 // pred_region
      %s26 = ssub.s32 1024, 1024
      %27 = vsyncadd [#allocation6], %s26
      %s28 = sshll.u32 [#allocation5], 4
      %s29 = int_to_ptr.vmem [resolvable:$true] %s28
      %34 = dma.hbm_to_vmem [thread:$0]  %s1, 1024, %s29, [#allocation6], 64, 64, 4
    $region9: #{tpu_custom_call.1} parent=1 // pred_fallthru
      _
    // Predicated region
    $region10: #{tpu_custom_call.1} parent=1 // pred_check
      _
    $region11: #{tpu_custom_call.1} parent=1 // pred_check_branch
      %36 = sbr.rel (0) target = $region13
    $region12: #{tpu_custom_call.1} parent=1 // pred_region
      _
    $region13: #{tpu_custom_call.1} parent=1 // pred_fallthru
      _
    // Predicated region
    $region14: #{tpu_custom_call.1} parent=1 // pred_check
      _
    $region15: #{tpu_custom_call.1} parent=1 // pred_check_branch
      %38 = sbr.rel (0) target = $region17
    $region16: #{tpu_custom_call.1} parent=1 // pred_region
      %39 = dma.done [#allocation3], 128
    $region17: #{tpu_custom_call.1} parent=1 // pred_fallthru
      _
    // Predicated region
    $region18: #{tpu_custom_call.1} parent=1 // pred_check
      _
    $region19: #{tpu_custom_call.1} parent=1 // pred_check_branch
      %41 = sbr.rel (0) target = $region21
    $region20: #{tpu_custom_call.1} parent=1 // pred_region
      %42 = dma.done [#allocation6], 1024
    $region21: #{tpu_custom_call.1} parent=1 // pred_fallthru
      _
    %v44 = vld [vmem:[#allocation2] sm:$0xf]
    %v45 = vld [vmem:[#allocation2 + $0x4] sm:$0xf]
    %v46 = vld [vmem:[#allocation5] sm:$0xf]
    %v47 = vld [vmem:[#allocation5 + $0x4] sm:$0xf]
    %v48 = vld [vmem:[#allocation5 + $0x8] sm:$0xf]
    %v49 = vld [vmem:[#allocation5 + $0xc] sm:$0xf]
    %v50 = vld [vmem:[#allocation5 + $0x10] sm:$0xf]
    %v51 = vld [vmem:[#allocation5 + $0x14] sm:$0xf]
    %v52 = vld [vmem:[#allocation5 + $0x18] sm:$0xf]
    %v53 = vld [vmem:[#allocation5 + $0x1c] sm:$0xf]
    %v54 = vld [vmem:[#allocation5 + $0x20] sm:$0xf]
    %v55 = vld [vmem:[#allocation5 + $0x24] sm:$0xf]
    %v56 = vld [vmem:[#allocation5 + $0x28] sm:$0xf]
    %v57 = vld [vmem:[#allocation5 + $0x2c] sm:$0xf]
    %v58 = vld [vmem:[#allocation5 + $0x30] sm:$0xf]
    %v59 = vld [vmem:[#allocation5 + $0x34] sm:$0xf]
    %v60 = vld [vmem:[#allocation5 + $0x38] sm:$0xf]
    %v61 = vld [vmem:[#allocation5 + $0x3c] sm:$0xf]
    %v64 = vunpack.c.l.b16 %v44
    %v65 = vunpack.c.l.b16 %v45
    %v66 = vpack.c.b16 %v65, %v64
    %v84 = vunpack.c.l.b16 %v46
    %v85 = vunpack.c.l.b16 %v47
    %v86 = vunpack.c.l.b16 %v48
    %v87 = vunpack.c.l.b16 %v49
    %v88 = vunpack.c.l.b16 %v50
    %v89 = vunpack.c.l.b16 %v51
    %v90 = vunpack.c.l.b16 %v52
    %v91 = vunpack.c.l.b16 %v53
    %v92 = vunpack.c.l.b16 %v54
    %v93 = vunpack.c.l.b16 %v55
    %v94 = vunpack.c.l.b16 %v56
    %v95 = vunpack.c.l.b16 %v57
    %v96 = vunpack.c.l.b16 %v58
    %v97 = vunpack.c.l.b16 %v59
    %v98 = vunpack.c.l.b16 %v60
    %v99 = vunpack.c.l.b16 %v61
    %v100 = vpack.c.b16 %v85, %v84
    %v101 = vpack.c.b16 %v87, %v86
    %v102 = vpack.c.b16 %v89, %v88
    %v103 = vpack.c.b16 %v91, %v90
    %v104 = vpack.c.b16 %v93, %v92
    %v105 = vpack.c.b16 %v95, %v94
    %v106 = vpack.c.b16 %v97, %v96
    %v107 = vpack.c.b16 %v99, %v98
    %116 = vmatprep.subr.bf16.mxu0 0
    %117 = vmatpush1.bf16.msra.mxu0 %v107
    %118 = vmatprep.subr.bf16.mxu0 0
    %119 = vmatpush1.bf16.msra.mxu0 %v106
    %120 = vmatprep.subr.bf16.mxu0 0
    %121 = vmatpush1.bf16.msra.mxu0 %v105
    %122 = vmatprep.subr.bf16.mxu0 0
    %123 = vmatpush1.bf16.msra.mxu0 %v104
    %124 = vmatprep.subr.bf16.mxu0 0
    %125 = vmatpush1.bf16.msra.mxu0 %v103
    %126 = vmatprep.subr.bf16.mxu0 0
    %127 = vmatpush1.bf16.msra.mxu0 %v102
    %128 = vmatprep.subr.bf16.mxu0 0
    %129 = vmatpush1.bf16.msra.mxu0 %v101
    %130 = vmatprep.subr.bf16.mxu0 0
    %131 = vmatpush1.bf16.msra.mxu0 %v100
    %132 = vmatprep.subr.bf16.mxu0 0
    %133 = vmatpush2.bf16.msra.mxu0 0
    %134 = vmatprep.subr.bf16.mxu0 0
    %135 = vmatpush2.bf16.msra.mxu0 0
    %136 = vmatprep.subr.bf16.mxu0 0
    %137 = vmatpush2.bf16.msra.mxu0 0
    %138 = vmatprep.subr.bf16.mxu0 0
    %139 = vmatpush2.bf16.msra.mxu0 0
    %140 = vmatprep.subr.bf16.mxu0 0
    %141 = vmatpush2.bf16.msra.mxu0 0
    %142 = vmatprep.subr.bf16.mxu0 0
    %143 = vmatpush2.bf16.msra.mxu0 0
    %144 = vmatprep.subr.bf16.mxu0 0
    %145 = vmatpush2.bf16.msra.mxu0 0
    %146 = vmatprep.subr.bf16.mxu0 0
    %147 = vmatpush2.bf16.msra.mxu0 0
    %148 = vmatprep.mubr.bf16.mxu0 0
    %149 = vmatmul.mubr.bf16.gmra.mxu0 %v66
    %v150 = vpop.f32.mrf.mxu0
    %v151 = vadd.f32 0.0, %v150
    %v152 = vpop.f32.mrf.mxu0
    %v153 = vpop.f32.mrf.mxu0
    %v154 = vadd.f32 0.0, %v153
    %v155 = vpop.f32.mrf.mxu0
    %156 = vdwg.mxu0
    %v157 = vld [vmem:[%s2] sm:$0x1]
    %v159 = vlaneseq
    %v160 = vshrl.u32 %v159, 7
    %v161 = vsub.s32 0, %v160
    %v162 = vrot.slane %v157, %v161
    %v164 = vsub.f32 %v151, %v162
    %v165 = vsub.f32 %v154, %v162
    %166 = vst [vmem:[#allocation7] sm:$0xff] %v164
    %167 = vst [vmem:[#allocation7 + $0x8] sm:$0xff] %v165
    // Predicated region
    $region22: #{tpu_custom_call.1} parent=1 // pred_check
      _
    $region23: #{tpu_custom_call.1} parent=1 // pred_check_branch
      %169 = sbr.rel (0) target = $region25
    $region24: #{tpu_custom_call.1} parent=1 // pred_region
      %s171 = ssub.s32 256, 256
      %172 = vsyncadd [#allocation4], %s171
      %s173 = sshll.u32 [#allocation7], 4
      %s174 = int_to_ptr.vmem [resolvable:$true] %s173
      %179 = dma.vmem_to_hbm [thread:$0]  %s174, 256, %s3, [#allocation4], 128, 128, 8
    $region25: #{tpu_custom_call.1} parent=1 // pred_fallthru
      _
    // Predicated region
    $region26: #{tpu_custom_call.1} parent=1 // pred_check
      _
    $region27: #{tpu_custom_call.1} parent=1 // pred_check_branch
      %181 = sbr.rel (0) target = $region29
    $region28: #{tpu_custom_call.1} parent=1 // pred_region
      %182 = dma.done [#allocation4], 256
    $region29: #{tpu_custom_call.1} parent=1 // pred_fallthru
      _
    %183 = vsyncpa [#allocation3], 1
    %184 = vsyncpa [#allocation6], 1
    %185 = vsyncpa [#allocation4], 1

</llo_original>
